<compile_context>
chip_gen: v6e
topology: v6e:2x2x1
jax: 0.10.0
libtpu: 0.0.40
codegen_flags: <defaults>
</compile_context>

<pallas_src>
import functools

import jax
import jax.numpy as jnp
from jax.experimental import pallas as pl
from jax.experimental.pallas import tpu as pltpu


def _round_up(x, m):
    return (x + m - 1) // m * m


def _vmem_limit_bytes():
    """Per-generation scoped-VMEM budget: 75% of physical VMEM.

    ~48 MiB on v7x (64 MiB physical), ~96 MiB on v5e/v6e (128 MiB physical).
    """
    try:
        cap = int(pltpu.get_tpu_info().vmem_capacity_bytes)
    except Exception:  # conservative fallback, sized for v7x
        cap = 64 * 1024 * 1024
    return (cap * 3) // 4


def _gblock_kernel(p_ref, w_ref, o_ref, *, hw_true, eps, activation, tile_hw):
    # p_ref: (1, CKK_pad, tile_hw)  bf16  channel-major im2col patches, one HW tile
    # w_ref: (tile_cout, CKK_pad)   bf16  flattened, zero-padded conv-weight tile
    # o_ref: (1, tile_cout, HW_pad) f32   channel-major output, resident across t
    t = pl.program_id(2)
    n_t = pl.num_programs(2)

    # Conv tile as a bf16 MXU matmul with f32 accumulation.  The result is
    # already channel-major, so it is stored directly at a lane-aligned offset
    # of the resident output block (no staging scratch, no transpose).
    # The Conv2d bias is intentionally omitted: under affine-free InstanceNorm
    # a per-channel constant cancels in the mean subtraction and leaves the
    # variance unchanged.
    y = jnp.dot(w_ref[...], p_ref[0], preferred_element_type=jnp.float32)
    col0 = pl.multiple_of(t * tile_hw, tile_hw)
    o_ref[0, :, pl.ds(col0, tile_hw)] = y

    @pl.when(t == n_t - 1)
    def _finalize():
        # In-VMEM finalize over the staged conv output: mean, masked two-read
        # variance (numerically safer than E[y^2] - mean^2), normalize, ReLU,
        # write back in place.  Zero-padded patch columns / weight rows give
        # y == 0 in the padding, so the mean only needs the true HW count; the
        # variance uses an explicit lane mask, which also keeps padded output
        # columns exactly zero after ReLU.
        y_all = o_ref[0]                                    # (tile_cout, HW_pad)
        inv_hw = 1.0 / float(hw_true)
        mean = jnp.sum(y_all, axis=1, keepdims=True) * inv_hw
        col = jax.lax.broadcasted_iota(jnp.int32, y_all.shape, 1)
        diff = jnp.where(col < hw_true, y_all - mean, 0.0)
        var = jnp.sum(diff * diff, axis=1, keepdims=True) * inv_hw
        z = diff * jax.lax.rsqrt(var + eps)
        if activation:
            z = jnp.maximum(z, 0.0)
        o_ref[0] = z.astype(o_ref.dtype)


def _im2col_nchw_cmajor(x, k, stride, padding):
    """NCHW -> (N, C*k*k, Ho*Wo) channel-major patches (no HW-major transpose)."""
    N, C, H, W = x.shape
    xp = jnp.pad(x, ((0, 0), (0, 0), (padding, padding), (padding, padding)))
    Ho = (H + 2 * padding - k) // stride + 1
    Wo = (W + 2 * padding - k) // stride + 1
    taps = []
    for di in range(k):
        for dj in range(k):
            taps.append(
                xp[:, :, di:di + Ho * stride:stride, dj:dj + Wo * stride:stride]
            )  # (N, C, Ho, Wo)
    p = jnp.stack(taps, axis=2)                        # (N, C, k*k, Ho, Wo)
    # Flattening (C, k*k) matches weight.reshape(Cout, C*k*k) tap ordering.
    return p.reshape(N, C * k * k, Ho * Wo), Ho, Wo


def gblock_forward(x_nchw, weight, bias=None, *, stride=1, padding=1,
                   activation=True, eps=1e-5, tile_hw=512, tile_cout=128):
    """GBlock forward (encoding=True path: Conv2d + InstanceNorm2d + ReLU).

    x_nchw: (N, Cin, H, W) float32
    weight: (Cout, Cin, K, K) float32 (PyTorch Conv2d layout)
    bias:   (Cout,) or None — ignored: it is a mathematical no-op under the
            affine-free InstanceNorm that follows the conv.
    returns (N, Cout, Ho, Wo) float32
    """
    del bias  # exactly cancelled by InstanceNorm(affine=False)
    N, Cin, H, W = x_nchw.shape
    Cout, _, K, _ = weight.shape

    # TODO(synk): im2col stays in XLA (9x input read amplification); in-kernel
    # 3x3 tap construction needs manual halo DMA (memory_space=pl.ANY) and is
    # the next HBM-traffic lever, especially on v5e.
    patches, Ho, Wo = _im2col_nchw_cmajor(x_nchw, K, stride, padding)  # (N,CKK,HW)
    HW = Ho * Wo
    CKK = Cin * K * K

    LANE = 128
    tile_hw = max(LANE, _round_up(min(tile_hw, _round_up(HW, LANE)), LANE))
    HW_pad = _round_up(HW, tile_hw)
    CKK_pad = _round_up(CKK, LANE)
    cout_pad0 = _round_up(Cout, LANE)
    tile_cout = min(max(LANE, _round_up(tile_cout, LANE)), cout_pad0)
    Cout_pad = _round_up(cout_pad0, tile_cout)
    n_t = HW_pad // tile_hw
    n_c = Cout_pad // tile_cout

    # Zero-pad to lane-dense shapes; bf16 matmul operands (f32 accumulation).
    patches = jnp.pad(patches, ((0, 0), (0, CKK_pad - CKK), (0, HW_pad - HW)))
    patches = patches.astype(jnp.bfloat16)
    w_flat = weight.reshape(Cout, CKK)                                # (Cout, CKK)
    w_flat = jnp.pad(w_flat, ((0, Cout_pad - Cout), (0, CKK_pad - CKK)))
    w_flat = w_flat.astype(jnp.bfloat16)

    kernel = functools.partial(
        _gblock_kernel, hw_true=HW, eps=eps, activation=activation,
        tile_hw=tile_hw)

    # TODO(synk): for layers where tile_cout*HW_pad*4B cannot fit VMEM even
    # after Cout tiling (e.g. 256x256 spatial, large Cout on v7x), fall back to
    # a two-pass scheme (conv+stats to HBM, then a small normalize+ReLU pass).
    out = pl.pallas_call(
        kernel,
        out_shape=jax.ShapeDtypeStruct((N, Cout_pad, HW_pad), jnp.float32),
        grid_spec=pltpu.PrefetchScalarGridSpec(
            num_scalar_prefetch=0,
            grid=(N, n_c, n_t),
            in_specs=[
                pl.BlockSpec((1, CKK_pad, tile_hw), lambda n, c, t: (n, 0, t)),
                # NOTE: the weight tile only changes with c (an outer axis); a
                # pl.Buffered(1) pipeline_mode would drop its second buffer —
                # skipped here to stay maximally portable across jax versions.
                pl.BlockSpec((tile_cout, CKK_pad), lambda n, c, t: (c, 0)),
            ],
            out_specs=pl.BlockSpec((1, tile_cout, HW_pad),
                                   lambda n, c, t: (n, c, 0)),
        ),
        compiler_params=pltpu.CompilerParams(
            dimension_semantics=("parallel", "parallel", "arbitrary"),
            vmem_limit_bytes=_vmem_limit_bytes(),
        ),
    )(patches, w_flat)                                   # (N, Cout_pad, HW_pad)

    # Output is already channel-major; strip padding and reshape to NCHW.
    # TODO(synk): emit bf16 output here if downstream layers accept it (halves
    # the writeback HBM bytes and the resident VMEM block).
    return out[:, :Cout, :HW].reshape(N, Cout, Ho, Wo)


def _reference_gblock(x, weight, bias, *, stride=1, padding=1,
                      activation=True, eps=1e-5):
    """Pure-JAX reference (lax conv + instance norm + relu) for validation."""
    y = jax.lax.conv_general_dilated(
        x, weight, window_strides=(stride, stride),
        padding=[(padding, padding), (padding, padding)],
        dimension_numbers=("NCHW", "OIHW", "NCHW"),
    ) + bias.reshape(1, -1, 1, 1)
    mean = jnp.mean(y, axis=(2, 3), keepdims=True)
    var = jnp.mean((y - mean) ** 2, axis=(2, 3), keepdims=True)
    y = (y - mean) * jax.lax.rsqrt(var + eps)
    if activation:
        y = jnp.maximum(y, 0.0)
    return y


if __name__ == "__main__":
    key = jax.random.PRNGKey(0)
    k_x, k_w, k_b = jax.random.split(key, 3)

    N, Cin, H, W = 2, 4, 16, 16
    Cout, K = 8, 3

    x = jax.random.normal(k_x, (N, Cin, H, W), dtype=jnp.float32)
    weight = 0.1 * jax.random.normal(k_w, (Cout, Cin, K, K), dtype=jnp.float32)
    bias = 0.1 * jax.random.normal(k_b, (Cout,), dtype=jnp.float32)

    # tile_hw=128 so the 16x16 demo (HW=256) exercises the multi-tile
    # resident-output + finalize path (2 spatial tiles per sample).
    out = gblock_forward(x, weight, bias, stride=1, padding=1,
                         activation=True, tile_hw=128)
    out = jax.block_until_ready(out)

    ref = _reference_gblock(x, weight, bias, stride=1, padding=1, activation=True)
    assert out.shape == (N, Cout, H, W)
    # bf16 matmul operands (f32 accumulation) vs an all-f32 reference.
    assert jnp.allclose(out, ref, rtol=3e-2, atol=3e-2), "mismatch vs reference"

    # TODO(synk): ConvTranspose2d (encoding=False) path not implemented; this
    # kernel reproduces the default encoding=True Conv2d path.
    print("KERNEL_OK")
</pallas_src>

<mosaic_0001>
module attributes {stable_mosaic.version = 11 : i64} {
  func.func @_gblock_kernel(%arg0: i32, %arg1: i32, %arg2: i32, %arg3: memref<1x128x128xbf16, #tpu.memory_space<vmem>>, %arg4: memref<128x128xbf16, #tpu.memory_space<vmem>>, %arg5: memref<1x128x256xf32, #tpu.memory_space<vmem>>) attributes {dimension_semantics = [#tpu.dimension_semantics<parallel>, #tpu.dimension_semantics<parallel>, #tpu.dimension_semantics<arbitrary>], iteration_bounds = array<i64: 2, 1, 2>, scalar_prefetch = 0 : i64, scratch_operands = 0 : i64, tpu.core_type = #tpu.core_type<tc>, window_params = [{transform_indices = @transform_0, window_bounds = array<i64: 1, 128, 128>}, {transform_indices = @transform_1, window_bounds = array<i64: 128, 128>}, {transform_indices = @transform_2, window_bounds = array<i64: 1, 128, 256>}]} {
    %c0 = arith.constant 0 : index
    %c0_0 = arith.constant 0 : index
    %0 = vector.load %arg4[%c0, %c0_0] : memref<128x128xbf16, #tpu.memory_space<vmem>>, vector<128x128xbf16>
    %c0_1 = arith.constant 0 : index
    %c0_2 = arith.constant 0 : index
    %c0_3 = arith.constant 0 : index
    %1 = vector.load %arg3[%c0_1, %c0_2, %c0_3] : memref<1x128x128xbf16, #tpu.memory_space<vmem>>, vector<1x128x128xbf16>
    %2 = vector.shape_cast %1 : vector<1x128x128xbf16> to vector<128x128xbf16>
    %cst = arith.constant dense<0.000000e+00> : vector<128x128xf32>
    %3 = tpu.matmul %0, %2, %cst {dimension_numbers = #tpu.dot_dimension_numbers<[1], [0], [0], [1], [0, 0, 1, 1], [], []>} : vector<128x128xbf16>, vector<128x128xbf16>, vector<128x128xf32> -> vector<128x128xf32>
    %c128_i32 = arith.constant 128 : i32
    %4 = arith.muli %arg2, %c128_i32 : i32
    %5 = tpu.assume_multiple %4, 128 : i32
    %c0_4 = arith.constant 0 : index
    %c0_5 = arith.constant 0 : index
    %6 = arith.index_cast %5 : i32 to index
    %7 = vector.load %arg5[%c0_4, %c0_5, %6] : memref<1x128x256xf32, #tpu.memory_space<vmem>>, vector<1x128x128xf32>
    %8 = vector.shape_cast %7 : vector<1x128x128xf32> to vector<128x128xf32>
    %9 = vector.shape_cast %3 : vector<128x128xf32> to vector<1x128x128xf32>
    tpu.vector_store %arg5[%c0_4, %c0_5, %6], %9 {strides = array<i32>} : memref<1x128x256xf32, #tpu.memory_space<vmem>>, vector<1x128x128xf32>,
    %c1_i32 = arith.constant 1 : i32
    %10 = arith.cmpi eq, %arg2, %c1_i32 : i32
    %11 = arith.extui %10 : i1 to i32
    %c0_i32 = arith.constant 0 : i32
    %12 = arith.cmpi ne, %11, %c0_i32 : i32
    scf.if %12 {
      %c0_6 = arith.constant 0 : index
      %c0_7 = arith.constant 0 : index
      %c0_8 = arith.constant 0 : index
      %13 = vector.load %arg5[%c0_6, %c0_7, %c0_8] : memref<1x128x256xf32, #tpu.memory_space<vmem>>, vector<1x128x256xf32>
      %14 = vector.shape_cast %13 : vector<1x128x256xf32> to vector<128x256xf32>
      %cst_9 = arith.constant dense<0.000000e+00> : vector<128xf32>
      %15 = vector.multi_reduction <add>, %14, %cst_9 [1] : vector<128x256xf32> to vector<128xf32>
      %16 = vector.shape_cast %15 : vector<128xf32> to vector<128x1xf32>
      %cst_10 = arith.constant 3.906250e-03 : f32
      %17 = vector.broadcast %cst_10 : f32 to vector<128x1xf32>
      %18 = arith.mulf %16, %17 : vector<128x1xf32>
      %19 = tpu.iota {dimensions = array<i32: 1>} : vector<128x256xi32>
      %c256_i32 = arith.constant 256 : i32
      %20 = vector.broadcast %c256_i32 : i32 to vector<128x256xi32>
      %21 = arith.cmpi slt, %19, %20 : vector<128x256xi32>
      %22 = vector.broadcast %18 : vector<128x1xf32> to vector<128x256xf32>
      %23 = arith.subf %14, %22 : vector<128x256xf32>
      %cst_11 = arith.constant 0.000000e+00 : f32
      %24 = vector.broadcast %cst_11 : f32 to vector<128x256xf32>
      %25 = arith.select %21, %23, %24 : vector<128x256xi1>, vector<128x256xf32>
      %26 = arith.mulf %25, %25 : vector<128x256xf32>
      %cst_12 = arith.constant dense<0.000000e+00> : vector<128xf32>
      %27 = vector.multi_reduction <add>, %26, %cst_12 [1] : vector<128x256xf32> to vector<128xf32>
      %28 = vector.shape_cast %27 : vector<128xf32> to vector<128x1xf32>
      %cst_13 = arith.constant 3.906250e-03 : f32
      %29 = vector.broadcast %cst_13 : f32 to vector<128x1xf32>
      %30 = arith.mulf %28, %29 : vector<128x1xf32>
      %cst_14 = arith.constant 9.99999974E-6 : f32
      %31 = vector.broadcast %cst_14 : f32 to vector<128x1xf32>
      %32 = arith.addf %30, %31 : vector<128x1xf32>
      %33 = math.rsqrt %32 : vector<128x1xf32>
      %34 = vector.broadcast %33 : vector<128x1xf32> to vector<128x256xf32>
      %35 = arith.mulf %25, %34 : vector<128x256xf32>
      %cst_15 = arith.constant 0.000000e+00 : f32
      %36 = vector.broadcast %cst_15 : f32 to vector<128x256xf32>
      %37 = arith.maximumf %35, %36 : vector<128x256xf32>
      %c0_16 = arith.constant 0 : index
      %c0_17 = arith.constant 0 : index
      %c0_18 = arith.constant 0 : index
      %38 = vector.load %arg5[%c0_16, %c0_17, %c0_18] : memref<1x128x256xf32, #tpu.memory_space<vmem>>, vector<1x128x256xf32>
      %39 = vector.shape_cast %38 : vector<1x128x256xf32> to vector<128x256xf32>
      %40 = vector.shape_cast %37 : vector<128x256xf32> to vector<1x128x256xf32>
      tpu.vector_store %arg5[%c0_16, %c0_17, %c0_18], %40 {strides = array<i32>} : memref<1x128x256xf32, #tpu.memory_space<vmem>>, vector<1x128x256xf32>,
    } else {
    }
    return
  }
  func.func @transform_0(%arg0: i32, %arg1: i32, %arg2: i32) -> (i32, i32, i32) {
    %c0_i32 = arith.constant 0 : i32
    %c0_i32_0 = arith.constant 0 : i32
    return %arg0, %c0_i32, %arg2 : i32, i32, i32
  }
  func.func @transform_1(%arg0: i32, %arg1: i32, %arg2: i32) -> (i32, i32) {
    %c0_i32 = arith.constant 0 : i32
    %c0_i32_0 = arith.constant 0 : i32
    return %arg1, %c0_i32 : i32, i32
  }
  func.func @transform_2(%arg0: i32, %arg1: i32, %arg2: i32) -> (i32, i32, i32) {
    %c0_i32 = arith.constant 0 : i32
    %c0_i32_0 = arith.constant 0 : i32
    return %arg0, %arg1, %c0_i32 : i32, i32, i32
  }
}

</mosaic_0001>

<llo_original>
// kernel: tpu_custom_call.1
$region0: #{tpu_custom_call.1}
  #allocation0 [shape = 'u32[]', space=smem, size = 0x4, offset = 0x4, fixed_abs, tag = 'smem constant byte address 0x4 - core index']
  #allocation1 [shape = 'u32[144,128]{1,0:T(1,128)}', space=vmem, size = 0x12000, scoped, tag = 'internal scratch']
  %s0 = inlined_call_operand.hbm [shape: bf16[2,128,256], index: 0, kind: input, shape index: {}]
  %s1 = inlined_call_operand.hbm [shape: bf16[128,128], index: 1, kind: input, shape index: {}]
  %s2 = inlined_call_operand.hbm [shape: f32[2,128,256], index: 2, kind: output, shape index: {}]
  %s3 = sld [smem:[#allocation0]]
  $region53: #{tpu_custom_call.1} parent=0
    _
  %s5 = ssub.s32 1, %s3
  %s6 = scalar_select 0, %s5, %s3
  $region1: #{tpu_custom_call.1} parent=0
    #allocation2 [shape = 'u8[65536]{0}', space=vmem, size = 0x10000, scoped, tag = 'input window, operand 0']
    #allocation3 [shape = 's32[2]{0}', space=sflag, size = 0x8, scoped, tag = 'scoped memory for tpu_custom_call.1']
    #allocation4 [shape = 's32[2]{0}', space=sflag, size = 0x8, scoped, tag = 'scoped memory for tpu_custom_call.1']
    #allocation5 [shape = 'u8[32768]{0}', space=vmem, size = 0x8000, scoped, tag = 'input window, operand 1, single buffered']
    #allocation6 [shape = 's32[1]{0}', space=sflag, size = 0x4, scoped, tag = 'scoped memory for tpu_custom_call.1']
    #allocation7 [shape = 'u8[262144]{0}', space=vmem, size = 0x40000, scoped, tag = 'output window, operand 0']
    %7 = vsyncpa [#allocation3], 0
    %s8 = scalar_lea.sflag [#allocation3], 1
    %9 = vsyncpa %s8, 0
    %10 = vsyncpa [#allocation6], 0
    %11 = vsyncpa [#allocation4], 0
    %s12 = scalar_lea.sflag [#allocation4], 1
    %13 = vsyncpa %s12, 0
    loop: start=0, step=1, limit=6
    $region2: #{tpu_custom_call.1} parent=1 // loop_pre_header
      _
    $region3: #{tpu_custom_call.1} parent=1 // loop_header
      %s15 = sphi 0, %s19
      %p16 = scmp.ge.s32.totalorder %s15, 6
      %s22 = sphi 0, %s41
      %s23 = sphi 0, %s37
      %s24 = sphi 0, %s33
      %s25 = sphi 0, %s22
      %s26 = sphi 0, %s23
      %s27 = sphi 0, %s24
      %s28 = sphi 0, %s25
      %s29 = sphi 0, %s26
      %s30 = sphi 0, %s27
      %s46 = sphi 0, %s48
      %s49 = sphi 0, %s46
      %s50 = sphi 0, %s49
      %s66 = sphi 0, %s50
      %s72 = sphi 0, %s74
      %s75 = sphi 0, %s72
      %s76 = sphi 0, %s75
      %s92 = sphi 0, %s76
      %s100 = sphi 0, %s102
      %s103 = sphi 0, %s100
      %s104 = sphi 0, %s103
      %s120 = sphi 0, %s104
    $region4: #{tpu_custom_call.1} parent=1 // loop_header_branch
      %18 = sbr.rel (%p16) target = $region8
    $region5: #{tpu_custom_call.1} parent=1 // loop_body
      %s20 = ssub.s32 %s15, 1
      %s21 = ssub.s32 %s15, 2
      %s31 = sadd.s32 1, %s24
      %p32 = scmp.ge.s32.totalorder %s31, 2
      %s33 = scalar_select %p32, 0, %s31
      %s34 = sadd.s32 1, %s23
      %s35 = scalar_select %p32, %s34, %s23
      %p36 = scmp.ge.s32.totalorder %s35, 1
      %s37 = scalar_select %p36, 0, %s35
      %s38 = sadd.s32 1, %s22
      %s39 = scalar_select %p36, %s38, %s22
      %p40 = scmp.ge.s32.totalorder %s39, 2
      %s41 = scalar_select %p40, 0, %s39
      %s42 = ssub.s32 %s22, %s41
      %s43 = ssub.s32 %s24, %s33
      %s44 = sor.u32 %s42, %s43
      %p45 = scmp.eq.s32.totalorder %s44, 0
      %s47 = sadd.s32 %s46, 1
      %s48 = scalar_select %p45, %s46, %s47
      %p51 = pneg %p45
      %p52 = scmp.eq.s32.totalorder %s15, 3
      %p53 = por %p51, %p52
      %p54 = scmp.ne.s32.totalorder %s46, %s49
      %p55 = scmp.eq.s32.totalorder %s15, 0
      %p56 = por %p54, %p55
      %p57 = scmp.ne.s32.totalorder %s46, %s49
      %p58 = scmp.eq.s32.totalorder %s20, 3
      %p59 = por %p57, %p58
      %p60 = scmp.ne.s32.totalorder %s49, %s50
      %p61 = scmp.eq.s32.totalorder %s20, 0
      %p62 = por %p60, %p61
      %p63 = scmp.ne.s32.totalorder %s49, %s50
      %p64 = scmp.eq.s32.totalorder %s21, 3
      %p65 = por %p63, %p64
      %p67 = scmp.ne.s32.totalorder %s50, %s66
      %p68 = scmp.eq.s32.totalorder %s21, 0
      %p69 = por %p67, %p68
      %s70 = ssub.s32 %s23, %s37
      %p71 = scmp.eq.s32.totalorder %s70, 0
      %s73 = sadd.s32 %s72, 1
      %s74 = scalar_select %p71, %s72, %s73
      %p77 = pneg %p71
      %p78 = scmp.eq.s32.totalorder %s15, 3
      %p79 = por %p77, %p78
      %p80 = scmp.ne.s32.totalorder %s72, %s75
      %p81 = scmp.eq.s32.totalorder %s15, 0
      %p82 = por %p80, %p81
      %p83 = scmp.ne.s32.totalorder %s72, %s75
      %p84 = scmp.eq.s32.totalorder %s20, 3
      %p85 = por %p83, %p84
      %p86 = scmp.ne.s32.totalorder %s75, %s76
      %p87 = scmp.eq.s32.totalorder %s20, 0
      %p88 = por %p86, %p87
      %p89 = scmp.ne.s32.totalorder %s75, %s76
      %p90 = scmp.eq.s32.totalorder %s21, 3
      %p91 = por %p89, %p90
      %p93 = scmp.ne.s32.totalorder %s76, %s92
      %p94 = scmp.eq.s32.totalorder %s21, 0
      %p95 = por %p93, %p94
      %s96 = ssub.s32 %s22, %s41
      %s97 = ssub.s32 %s23, %s37
      %s98 = sor.u32 %s96, %s97
      %p99 = scmp.eq.s32.totalorder %s98, 0
      %s101 = sadd.s32 %s100, 1
      %s102 = scalar_select %p99, %s100, %s101
      %p105 = pneg %p99
      %p106 = scmp.eq.s32.totalorder %s15, 3
      %p107 = por %p105, %p106
      %p108 = scmp.ne.s32.totalorder %s100, %s103
      %p109 = scmp.eq.s32.totalorder %s15, 0
      %p110 = por %p108, %p109
      %p111 = scmp.ne.s32.totalorder %s100, %s103
      %p112 = scmp.eq.s32.totalorder %s20, 3
      %p113 = por %p111, %p112
      %p114 = scmp.ne.s32.totalorder %s103, %s104
      %p115 = scmp.eq.s32.totalorder %s20, 0
      %p116 = por %p114, %p115
      %p117 = scmp.ne.s32.totalorder %s103, %s104
      %p118 = scmp.eq.s32.totalorder %s21, 3
      %p119 = por %p117, %p118
      %p121 = scmp.ne.s32.totalorder %s104, %s120
      %p122 = scmp.eq.s32.totalorder %s21, 0
      %p123 = por %p121, %p122
      %p124 = scmp.le.s32.totalorder 1, %s15
      %p125 = scmp.lt.s32.totalorder %s15, 5
      %p126 = pnand %p124, %p125
      %p127 = pneg %p126
      // Predicated region
      $region9: #{tpu_custom_call.1} parent=5 // pred_check
        _
      $region10: #{tpu_custom_call.1} parent=5 // pred_check_branch
        %129 = sbr.rel (%p126) target = $region12
      $region11: #{tpu_custom_call.1} parent=5 // pred_region
        %s130 = ssub.s32 %s15, 1
        // Predicated region
        $region13: #{tpu_custom_call.1} parent=11 // pred_check
          %p131 = pneg %p88
        $region14: #{tpu_custom_call.1} parent=11 // pred_check_branch
          %133 = sbr.rel (%p131) target = $region16
        $region15: #{tpu_custom_call.1} parent=11 // pred_region
          %s134 = smul.u32 16, %s26
          %s136 = ssub.s32 1024, 1024
          %137 = vsyncadd [#allocation6], %s136
          %s138 = smul.addr %s134, 64
          %s139 = scalar_lea.hbm %s1, %s138
          %s140 = sshll.u32 [#allocation5], 4
          %s141 = int_to_ptr.vmem [resolvable:$true] %s140
          %146 = dma.hbm_to_vmem [thread:$0]  %s139, 1024, %s141, [#allocation6], 64, 64, 4
        $region16: #{tpu_custom_call.1} parent=11 // pred_fallthru
          _
      $region12: #{tpu_custom_call.1} parent=5 // pred_fallthru
        _
      %p147 = scmp.lt.s32.totalorder %s15, 4
      // Predicated region
      $region17: #{tpu_custom_call.1} parent=5 // pred_check
        %p148 = pneg %p147
      $region18: #{tpu_custom_call.1} parent=5 // pred_check_branch
        %150 = sbr.rel (%p148) target = $region20
      $region19: #{tpu_custom_call.1} parent=5 // pred_region
        // Predicated region
        $region21: #{tpu_custom_call.1} parent=19 // pred_check
          %p151 = pneg %p56
        $region22: #{tpu_custom_call.1} parent=19 // pred_check_branch
          %153 = sbr.rel (%p151) target = $region24
        $region23: #{tpu_custom_call.1} parent=19 // pred_region
          %s154 = sand.u32 %s46, 1
          %s155 = scalar_lea.sflag [#allocation3], %s154
          %s156 = sand.u32 %s46, 1
          %s157 = smul.addr %s156, 64
          %s158 = scalar_lea.vmem [#allocation2], %s157
          %s160 = ssub.s32 1024, 1024
          %161 = vsyncadd %s155, %s160
          %s162 = smul.addr %s22, 32
          %s163 = sadd.s32 %s24, %s162
          %s164 = smul.addr %s163, 64
          %s165 = scalar_lea.hbm %s0, %s164
          %s166 = sshll.u32 %s158, 4
          %s167 = int_to_ptr.vmem [resolvable:$true] %s166
          %172 = dma.hbm_to_vmem [thread:$0]  %s165, 1024, %s167, %s155, 128, 64, 4
        $region24: #{tpu_custom_call.1} parent=19 // pred_fallthru
          _
      $region20: #{tpu_custom_call.1} parent=5 // pred_fallthru
        _
      %p173 = scmp.le.s32.totalorder 1, %s15
      %p174 = scmp.lt.s32.totalorder %s15, 5
      %p175 = pnand %p173, %p174
      %p176 = pneg %p175
      // Predicated region
      $region25: #{tpu_custom_call.1} parent=5 // pred_check
        _
      $region26: #{tpu_custom_call.1} parent=5 // pred_check_branch
        %178 = sbr.rel (%p175) target = $region28
      $region27: #{tpu_custom_call.1} parent=5 // pred_region
        %s179 = ssub.s32 %s15, 1
        %s180 = sand.u32 %s49, 1
        %s181 = scalar_lea.sflag [#allocation3], %s180
        %s182 = sand.u32 %s49, 1
        %s183 = smul.addr %s182, 64
        %s184 = scalar_lea.vmem [#allocation2], %s183
        // Predicated region
        $region29: #{tpu_custom_call.1} parent=27 // pred_check
          %p185 = pneg %p62
        $region30: #{tpu_custom_call.1} parent=27 // pred_check_branch
          %187 = sbr.rel (%p185) target = $region32
        $region31: #{tpu_custom_call.1} parent=27 // pred_region
          %188 = dma.done %s181, 1024
        $region32: #{tpu_custom_call.1} parent=27 // pred_fallthru
          _
        // Predicated region
        $region33: #{tpu_custom_call.1} parent=27 // pred_check
          %p189 = pneg %p88
        $region34: #{tpu_custom_call.1} parent=27 // pred_check_branch
          %191 = sbr.rel (%p189) target = $region36
        $region35: #{tpu_custom_call.1} parent=27 // pred_region
          %192 = dma.done [#allocation6], 1024
        $region36: #{tpu_custom_call.1} parent=27 // pred_fallthru
          _
        %s193 = sand.u32 %s49, 1
        %s194 = scalar_lea.sflag [#allocation3], %s193
        %s195 = sand.u32 %s49, 1
        %s196 = smul.addr %s195, 64
        %s197 = scalar_lea.vmem [#allocation2], %s196
        %p198 = pneg %p62
        %p199 = pneg %p59
        %p200 = pneg %p88
        %p201 = pneg %p85
        %p202 = pneg %p116
        %p203 = pneg %p113
        %s204 = sand.u32 %s103, 1
        %s205 = scalar_lea.sflag [#allocation4], %s204
        %s206 = sand.u32 %s103, 1
        %s207 = smul.addr %s206, 256
        %s208 = scalar_lea.vmem [#allocation7], %s207
        %s209 = smul.u32 16, %s26
        %s210 = smul.u32 16, %s26
        %v212 = vld [vmem:[#allocation5] sm:$0xf]
        %v213 = vld [vmem:[#allocation5 + $0x4] sm:$0xf]
        %v214 = vld [vmem:[#allocation5 + $0x8] sm:$0xf]
        %v215 = vld [vmem:[#allocation5 + $0xc] sm:$0xf]
        %v216 = vld [vmem:[#allocation5 + $0x10] sm:$0xf]
        %v217 = vld [vmem:[#allocation5 + $0x14] sm:$0xf]
        %v218 = vld [vmem:[#allocation5 + $0x18] sm:$0xf]
        %v219 = vld [vmem:[#allocation5 + $0x1c] sm:$0xf]
        %v220 = vld [vmem:[#allocation5 + $0x20] sm:$0xf]
        %v221 = vld [vmem:[#allocation5 + $0x24] sm:$0xf]
        %v222 = vld [vmem:[#allocation5 + $0x28] sm:$0xf]
        %v223 = vld [vmem:[#allocation5 + $0x2c] sm:$0xf]
        %v224 = vld [vmem:[#allocation5 + $0x30] sm:$0xf]
        %v225 = vld [vmem:[#allocation5 + $0x34] sm:$0xf]
        %v226 = vld [vmem:[#allocation5 + $0x38] sm:$0xf]
        %v227 = vld [vmem:[#allocation5 + $0x3c] sm:$0xf]
        %v228 = vld [vmem:[%s184] sm:$0xf]
        %v229 = vld [vmem:[%s184 + $0x4] sm:$0xf]
        %v230 = vld [vmem:[%s184 + $0x8] sm:$0xf]
        %v231 = vld [vmem:[%s184 + $0xc] sm:$0xf]
        %v232 = vld [vmem:[%s184 + $0x10] sm:$0xf]
        %v233 = vld [vmem:[%s184 + $0x14] sm:$0xf]
        %v234 = vld [vmem:[%s184 + $0x18] sm:$0xf]
        %v235 = vld [vmem:[%s184 + $0x1c] sm:$0xf]
        %v236 = vld [vmem:[%s184 + $0x20] sm:$0xf]
        %v237 = vld [vmem:[%s184 + $0x24] sm:$0xf]
        %v238 = vld [vmem:[%s184 + $0x28] sm:$0xf]
        %v239 = vld [vmem:[%s184 + $0x2c] sm:$0xf]
        %v240 = vld [vmem:[%s184 + $0x30] sm:$0xf]
        %v241 = vld [vmem:[%s184 + $0x34] sm:$0xf]
        %v242 = vld [vmem:[%s184 + $0x38] sm:$0xf]
        %v243 = vld [vmem:[%s184 + $0x3c] sm:$0xf]
        %v260 = vunpack.c.l.b16 %v212
        %v261 = vunpack.c.l.b16 %v213
        %v262 = vunpack.c.l.b16 %v214
        %v263 = vunpack.c.l.b16 %v215
        %v264 = vunpack.c.l.b16 %v216
        %v265 = vunpack.c.l.b16 %v217
        %v266 = vunpack.c.l.b16 %v218
        %v267 = vunpack.c.l.b16 %v219
        %v268 = vunpack.c.l.b16 %v220
        %v269 = vunpack.c.l.b16 %v221
        %v270 = vunpack.c.l.b16 %v222
        %v271 = vunpack.c.l.b16 %v223
        %v272 = vunpack.c.l.b16 %v224
        %v273 = vunpack.c.l.b16 %v225
        %v274 = vunpack.c.l.b16 %v226
        %v275 = vunpack.c.l.b16 %v227
        %v276 = vpack.c.b16 %v261, %v260
        %v277 = vpack.c.b16 %v263, %v262
        %v278 = vpack.c.b16 %v265, %v264
        %v279 = vpack.c.b16 %v267, %v266
        %v280 = vpack.c.b16 %v269, %v268
        %v281 = vpack.c.b16 %v271, %v270
        %v282 = vpack.c.b16 %v273, %v272
        %v283 = vpack.c.b16 %v275, %v274
        %v308 = vunpack.c.l.b16 %v228
        %v309 = vunpack.c.l.b16 %v229
        %v310 = vunpack.c.l.b16 %v230
        %v311 = vunpack.c.l.b16 %v231
        %v312 = vunpack.c.l.b16 %v232
        %v313 = vunpack.c.l.b16 %v233
        %v314 = vunpack.c.l.b16 %v234
        %v315 = vunpack.c.l.b16 %v235
        %v316 = vunpack.c.l.b16 %v236
        %v317 = vunpack.c.l.b16 %v237
        %v318 = vunpack.c.l.b16 %v238
        %v319 = vunpack.c.l.b16 %v239
        %v320 = vunpack.c.l.b16 %v240
        %v321 = vunpack.c.l.b16 %v241
        %v322 = vunpack.c.l.b16 %v242
        %v323 = vunpack.c.l.b16 %v243
        %v324 = vpack.c.b16 %v309, %v308
        %v325 = vpack.c.b16 %v311, %v310
        %v326 = vpack.c.b16 %v313, %v312
        %v327 = vpack.c.b16 %v315, %v314
        %v328 = vpack.c.b16 %v317, %v316
        %v329 = vpack.c.b16 %v319, %v318
        %v330 = vpack.c.b16 %v321, %v320
        %v331 = vpack.c.b16 %v323, %v322
        %340 = vmatprep.subr.bf16.mxu0 0
        %341 = vmatpush1.bf16.msra.mxu0 %v331
        %342 = vmatprep.subr.bf16.mxu0 0
        %343 = vmatpush1.bf16.msra.mxu0 %v330
        %344 = vmatprep.subr.bf16.mxu0 0
        %345 = vmatpush1.bf16.msra.mxu0 %v329
        %346 = vmatprep.subr.bf16.mxu0 0
        %347 = vmatpush1.bf16.msra.mxu0 %v328
        %348 = vmatprep.subr.bf16.mxu0 0
        %349 = vmatpush1.bf16.msra.mxu0 %v327
        %350 = vmatprep.subr.bf16.mxu0 0
        %351 = vmatpush1.bf16.msra.mxu0 %v326
        %352 = vmatprep.subr.bf16.mxu0 0
        %353 = vmatpush1.bf16.msra.mxu0 %v325
        %354 = vmatprep.subr.bf16.mxu0 0
        %355 = vmatpush1.bf16.msra.mxu0 %v324
        %356 = vmatprep.subr.bf16.mxu0 0
        %357 = vmatpush2.bf16.msra.mxu0 0
        %358 = vmatprep.subr.bf16.mxu0 0
        %359 = vmatpush2.bf16.msra.mxu0 0
        %360 = vmatprep.subr.bf16.mxu0 0
        %361 = vmatpush2.bf16.msra.mxu0 0
        %362 = vmatprep.subr.bf16.mxu0 0
        %363 = vmatpush2.bf16.msra.mxu0 0
        %364 = vmatprep.subr.bf16.mxu0 0
        %365 = vmatpush2.bf16.msra.mxu0 0
        %366 = vmatprep.subr.bf16.mxu0 0
        %367 = vmatpush2.bf16.msra.mxu0 0
        %368 = vmatprep.subr.bf16.mxu0 0
        %369 = vmatpush2.bf16.msra.mxu0 0
        %370 = vmatprep.subr.bf16.mxu0 0
        %371 = vmatpush2.bf16.msra.mxu0 0
        %372 = vmatprep.mubr.bf16.mxu0 0
        %373 = vmatmul.mubr.bf16.gmra.mxu0 %v276
        %v374 = vpop.f32.mrf.mxu0
        %v375 = vadd.f32 0.0, %v374
        %v376 = vpop.f32.mrf.mxu0
        %v377 = vpop.f32.mrf.mxu0
        %v378 = vadd.f32 0.0, %v377
        %v379 = vpop.f32.mrf.mxu0
        %380 = vmatprep.mubr.bf16.mxu0 0
        %381 = vmatmul.mubr.bf16.gmra.mxu0 %v277
        %v382 = vpop.f32.mrf.mxu0
        %v383 = vadd.f32 0.0, %v382
        %v384 = vpop.f32.mrf.mxu0
        %v385 = vpop.f32.mrf.mxu0
        %v386 = vadd.f32 0.0, %v385
        %v387 = vpop.f32.mrf.mxu0
        %388 = vmatprep.mubr.bf16.mxu0 0
        %389 = vmatmul.mubr.bf16.gmra.mxu0 %v278
        %v390 = vpop.f32.mrf.mxu0
        %v391 = vadd.f32 0.0, %v390
        %v392 = vpop.f32.mrf.mxu0
        %v393 = vpop.f32.mrf.mxu0
        %v394 = vadd.f32 0.0, %v393
        %v395 = vpop.f32.mrf.mxu0
        %396 = vmatprep.mubr.bf16.mxu0 0
        %397 = vmatmul.mubr.bf16.gmra.mxu0 %v279
        %v398 = vpop.f32.mrf.mxu0
        %v399 = vadd.f32 0.0, %v398
        %v400 = vpop.f32.mrf.mxu0
        %v401 = vpop.f32.mrf.mxu0
        %v402 = vadd.f32 0.0, %v401
        %v403 = vpop.f32.mrf.mxu0
        %404 = vmatprep.mubr.bf16.mxu0 0
        %405 = vmatmul.mubr.bf16.gmra.mxu0 %v280
        %v406 = vpop.f32.mrf.mxu0
        %v407 = vadd.f32 0.0, %v406
        %v408 = vpop.f32.mrf.mxu0
        %v409 = vpop.f32.mrf.mxu0
        %v410 = vadd.f32 0.0, %v409
        %v411 = vpop.f32.mrf.mxu0
        %412 = vmatprep.mubr.bf16.mxu0 0
        %413 = vmatmul.mubr.bf16.gmra.mxu0 %v281
        %v414 = vpop.f32.mrf.mxu0
        %v415 = vadd.f32 0.0, %v414
        %v416 = vpop.f32.mrf.mxu0
        %v417 = vpop.f32.mrf.mxu0
        %v418 = vadd.f32 0.0, %v417
        %v419 = vpop.f32.mrf.mxu0
        %420 = vmatprep.mubr.bf16.mxu0 0
        %421 = vmatmul.mubr.bf16.gmra.mxu0 %v282
        %v422 = vpop.f32.mrf.mxu0
        %v423 = vadd.f32 0.0, %v422
        %v424 = vpop.f32.mrf.mxu0
        %v425 = vpop.f32.mrf.mxu0
        %v426 = vadd.f32 0.0, %v425
        %v427 = vpop.f32.mrf.mxu0
        %428 = vmatprep.mubr.bf16.mxu0 0
        %429 = vmatmul.mubr.bf16.gmra.mxu0 %v283
        %v430 = vpop.f32.mrf.mxu0
        %v431 = vadd.f32 0.0, %v430
        %v432 = vpop.f32.mrf.mxu0
        %v433 = vpop.f32.mrf.mxu0
        %v434 = vadd.f32 0.0, %v433
        %v435 = vpop.f32.mrf.mxu0
        %436 = vdwg.mxu0
        %s437 = smul.u32 %s27, 128
        %s438 = sshra.s32 %s437, 7
        %s439 = sand.u32 %s437, 127
        %s440 = smul.addr %s438, 8
        %s441 = scalar_lea.vmem %s208, %s440 [#allocation7]
        %442 = vst [vmem:[%s441] sm:$0xff] %v375
        %443 = vst [vmem:[%s441 + $0x10] sm:$0xff] %v378
        %444 = vst [vmem:[%s441 + $0x20] sm:$0xff] %v383
        %445 = vst [vmem:[%s441 + $0x30] sm:$0xff] %v386
        %446 = vst [vmem:[%s441 + $0x40] sm:$0xff] %v391
        %447 = vst [vmem:[%s441 + $0x50] sm:$0xff] %v394
        %448 = vst [vmem:[%s441 + $0x60] sm:$0xff] %v399
        %449 = vst [vmem:[%s441 + $0x70] sm:$0xff] %v402
        %450 = vst [vmem:[%s441 + $0x80] sm:$0xff] %v407
        %451 = vst [vmem:[%s441 + $0x90] sm:$0xff] %v410
        %452 = vst [vmem:[%s441 + $0xa0] sm:$0xff] %v415
        %453 = vst [vmem:[%s441 + $0xb0] sm:$0xff] %v418
        %454 = vst [vmem:[%s441 + $0xc0] sm:$0xff] %v423
        %455 = vst [vmem:[%s441 + $0xd0] sm:$0xff] %v426
        %456 = vst [vmem:[%s441 + $0xe0] sm:$0xff] %v431
        %457 = vst [vmem:[%s441 + $0xf0] sm:$0xff] %v434
        %p458 = scmp.eq.s32.totalorder %s27, 1
        // Predicated region
        $region37: #{tpu_custom_call.1} parent=27 // pred_check
          %p459 = pneg %p458
        $region38: #{tpu_custom_call.1} parent=27 // pred_check_branch
          %461 = sbr.rel (%p459) target = $region40
        $region39: #{tpu_custom_call.1} parent=27 // pred_region
          %v462 = vld [vmem:[%s208] sm:$0xff]
          %v463 = vld [vmem:[%s208 + $0x8] sm:$0xff]
          %v464 = vld [vmem:[%s208 + $0x10] sm:$0xff]
          %v465 = vld [vmem:[%s208 + $0x18] sm:$0xff]
          %v466 = vld [vmem:[%s208 + $0x20] sm:$0xff]
          %v467 = vld [vmem:[%s208 + $0x28] sm:$0xff]
          %v468 = vld [vmem:[%s208 + $0x30] sm:$0xff]
          %v469 = vld [vmem:[%s208 + $0x38] sm:$0xff]
          %v470 = vld [vmem:[%s208 + $0x40] sm:$0xff]
          %v471 = vld [vmem:[%s208 + $0x48] sm:$0xff]
          %v472 = vld [vmem:[%s208 + $0x50] sm:$0xff]
          %v473 = vld [vmem:[%s208 + $0x58] sm:$0xff]
          %v474 = vld [vmem:[%s208 + $0x60] sm:$0xff]
          %v475 = vld [vmem:[%s208 + $0x68] sm:$0xff]
          %v476 = vld [vmem:[%s208 + $0x70] sm:$0xff]
          %v477 = vld [vmem:[%s208 + $0x78] sm:$0xff]
          %v478 = vld [vmem:[%s208 + $0x80] sm:$0xff]
          %v479 = vld [vmem:[%s208 + $0x88] sm:$0xff]
          %v480 = vld [vmem:[%s208 + $0x90] sm:$0xff]
          %v481 = vld [vmem:[%s208 + $0x98] sm:$0xff]
          %v482 = vld [vmem:[%s208 + $0xa0] sm:$0xff]
          %v483 = vld [vmem:[%s208 + $0xa8] sm:$0xff]
          %v484 = vld [vmem:[%s208 + $0xb0] sm:$0xff]
          %v485 = vld [vmem:[%s208 + $0xb8] sm:$0xff]
          %v486 = vld [vmem:[%s208 + $0xc0] sm:$0xff]
          %v487 = vld [vmem:[%s208 + $0xc8] sm:$0xff]
          %v488 = vld [vmem:[%s208 + $0xd0] sm:$0xff]
          %v489 = vld [vmem:[%s208 + $0xd8] sm:$0xff]
          %v490 = vld [vmem:[%s208 + $0xe0] sm:$0xff]
          %v491 = vld [vmem:[%s208 + $0xe8] sm:$0xff]
          %v492 = vld [vmem:[%s208 + $0xf0] sm:$0xff]
          %v493 = vld [vmem:[%s208 + $0xf8] sm:$0xff]
          %v494 = vadd.f32 %v462, %v463
          %495 = vadd.xlane.f32.xlu0 %v494
          %v496 = vpop.xlane.xlu0 %495
          %v497 = vadd.f32 %v464, %v465
          %498 = vadd.xlane.f32.xlu0 %v497
          %v499 = vpop.xlane.xlu0 %498
          %v500 = vadd.f32 %v466, %v467
          %501 = vadd.xlane.f32.xlu0 %v500
          %v502 = vpop.xlane.xlu0 %501
          %v503 = vadd.f32 %v468, %v469
          %504 = vadd.xlane.f32.xlu0 %v503
          %v505 = vpop.xlane.xlu0 %504
          %v506 = vadd.f32 %v470, %v471
          %507 = vadd.xlane.f32.xlu0 %v506
          %v508 = vpop.xlane.xlu0 %507
          %v509 = vadd.f32 %v472, %v473
          %510 = vadd.xlane.f32.xlu0 %v509
          %v511 = vpop.xlane.xlu0 %510
          %v512 = vadd.f32 %v474, %v475
          %513 = vadd.xlane.f32.xlu0 %v512
          %v514 = vpop.xlane.xlu0 %513
          %v515 = vadd.f32 %v476, %v477
          %516 = vadd.xlane.f32.xlu0 %v515
          %v517 = vpop.xlane.xlu0 %516
          %v518 = vadd.f32 %v478, %v479
          %519 = vadd.xlane.f32.xlu0 %v518
          %v520 = vpop.xlane.xlu0 %519
          %v521 = vadd.f32 %v480, %v481
          %522 = vadd.xlane.f32.xlu0 %v521
          %v523 = vpop.xlane.xlu0 %522
          %v524 = vadd.f32 %v482, %v483
          %525 = vadd.xlane.f32.xlu0 %v524
          %v526 = vpop.xlane.xlu0 %525
          %v527 = vadd.f32 %v484, %v485
          %528 = vadd.xlane.f32.xlu0 %v527
          %v529 = vpop.xlane.xlu0 %528
          %v530 = vadd.f32 %v486, %v487
          %531 = vadd.xlane.f32.xlu0 %v530
          %v532 = vpop.xlane.xlu0 %531
          %v533 = vadd.f32 %v488, %v489
          %534 = vadd.xlane.f32.xlu0 %v533
          %v535 = vpop.xlane.xlu0 %534
          %v536 = vadd.f32 %v490, %v491
          %537 = vadd.xlane.f32.xlu0 %v536
          %v538 = vpop.xlane.xlu0 %537
          %v539 = vadd.f32 %v492, %v493
          %540 = vadd.xlane.f32.xlu0 %v539
          %v541 = vpop.xlane.xlu0 %540
          %v542 = vmul.f32 %v496, 0.00390625
          %v543 = vmul.f32 %v499, 0.00390625
          %v544 = vmul.f32 %v502, 0.00390625
          %v545 = vmul.f32 %v505, 0.00390625
          %v546 = vmul.f32 %v508, 0.00390625
          %v547 = vmul.f32 %v511, 0.00390625
          %v548 = vmul.f32 %v514, 0.00390625
          %v549 = vmul.f32 %v517, 0.00390625
          %v550 = vmul.f32 %v520, 0.00390625
          %v551 = vmul.f32 %v523, 0.00390625
          %v552 = vmul.f32 %v526, 0.00390625
          %v553 = vmul.f32 %v529, 0.00390625
          %v554 = vmul.f32 %v532, 0.00390625
          %v555 = vmul.f32 %v535, 0.00390625
          %v556 = vmul.f32 %v538, 0.00390625
          %v557 = vmul.f32 %v541, 0.00390625
          %v558 = vlaneseq
          %v559 = vand.u32 %v558, 127
          %v560 = vadd.s32 %v559, 128
          %vm561 = vcmp.lt.s32.totalorder %v559, 256
          %vm562 = vcmp.lt.s32.totalorder %v560, 256
          %v563 = vsub.f32 %v462, %v542
          %v564 = vsub.f32 %v463, %v542
          %v565 = vsub.f32 %v464, %v543
          %v566 = vsub.f32 %v465, %v543
          %v567 = vsub.f32 %v466, %v544
          %v568 = vsub.f32 %v467, %v544
          %v569 = vsub.f32 %v468, %v545
          %v570 = vsub.f32 %v469, %v545
          %v571 = vsub.f32 %v470, %v546
          %v572 = vsub.f32 %v471, %v546
          %v573 = vsub.f32 %v472, %v547
          %v574 = vsub.f32 %v473, %v547
          %v575 = vsub.f32 %v474, %v548
          %v576 = vsub.f32 %v475, %v548
          %v577 = vsub.f32 %v476, %v549
          %v578 = vsub.f32 %v477, %v549
          %v579 = vsub.f32 %v478, %v550
          %v580 = vsub.f32 %v479, %v550
          %v581 = vsub.f32 %v480, %v551
          %v582 = vsub.f32 %v481, %v551
          %v583 = vsub.f32 %v482, %v552
          %v584 = vsub.f32 %v483, %v552
          %v585 = vsub.f32 %v484, %v553
          %v586 = vsub.f32 %v485, %v553
          %v587 = vsub.f32 %v486, %v554
          %v588 = vsub.f32 %v487, %v554
          %v589 = vsub.f32 %v488, %v555
          %v590 = vsub.f32 %v489, %v555
          %v591 = vsub.f32 %v490, %v556
          %v592 = vsub.f32 %v491, %v556
          %v593 = vsub.f32 %v492, %v557
          %v594 = vsub.f32 %v493, %v557
          %v595 = vsel %vm561, %v563, 0.0
          %v596 = vsel %vm562, %v564, 0.0
          %v597 = vsel %vm561, %v565, 0.0
          %v598 = vsel %vm562, %v566, 0.0
          %v599 = vsel %vm561, %v567, 0.0
          %v600 = vsel %vm562, %v568, 0.0
          %v601 = vsel %vm561, %v569, 0.0
          %v602 = vsel %vm562, %v570, 0.0
          %v603 = vsel %vm561, %v571, 0.0
          %v604 = vsel %vm562, %v572, 0.0
          %v605 = vsel %vm561, %v573, 0.0
          %v606 = vsel %vm562, %v574, 0.0
          %v607 = vsel %vm561, %v575, 0.0
          %v608 = vsel %vm562, %v576, 0.0
          %v609 = vsel %vm561, %v577, 0.0
          %v610 = vsel %vm562, %v578, 0.0
          %v611 = vsel %vm561, %v579, 0.0
          %v612 = vsel %vm562, %v580, 0.0
          %v613 = vsel %vm561, %v581, 0.0
          %v614 = vsel %vm562, %v582, 0.0
          %v615 = vsel %vm561, %v583, 0.0
          %v616 = vsel %vm562, %v584, 0.0
          %v617 = vsel %vm561, %v585, 0.0
          %v618 = vsel %vm562, %v586, 0.0
          %v619 = vsel %vm561, %v587, 0.0
          %v620 = vsel %vm562, %v588, 0.0
          %v621 = vsel %vm561, %v589, 0.0
          %v622 = vsel %vm562, %v590, 0.0
          %v623 = vsel %vm561, %v591, 0.0
          %v624 = vsel %vm562, %v592, 0.0
          %v625 = vsel %vm561, %v593, 0.0
          %v626 = vsel %vm562, %v594, 0.0
          %v627 = vmul.f32 %v595, %v595
          %v628 = vmul.f32 %v596, %v596
          %v629 = vmul.f32 %v597, %v597
          %v630 = vmul.f32 %v598, %v598
          %v631 = vmul.f32 %v599, %v599
          %v632 = vmul.f32 %v600, %v600
          %v633 = vmul.f32 %v601, %v601
          %v634 = vmul.f32 %v602, %v602
          %v635 = vmul.f32 %v603, %v603
          %v636 = vmul.f32 %v604, %v604
          %v637 = vmul.f32 %v605, %v605
          %v638 = vmul.f32 %v606, %v606
          %v639 = vmul.f32 %v607, %v607
          %v640 = vmul.f32 %v608, %v608
          %v641 = vmul.f32 %v609, %v609
          %v642 = vmul.f32 %v610, %v610
          %v643 = vmul.f32 %v611, %v611
          %v644 = vmul.f32 %v612, %v612
          %v645 = vmul.f32 %v613, %v613
          %v646 = vmul.f32 %v614, %v614
          %v647 = vmul.f32 %v615, %v615
          %v648 = vmul.f32 %v616, %v616
          %v649 = vmul.f32 %v617, %v617
          %v650 = vmul.f32 %v618, %v618
          %v651 = vmul.f32 %v619, %v619
          %v652 = vmul.f32 %v620, %v620
          %v653 = vmul.f32 %v621, %v621
          %v654 = vmul.f32 %v622, %v622
          %v655 = vmul.f32 %v623, %v623
          %v656 = vmul.f32 %v624, %v624
          %v657 = vmul.f32 %v625, %v625
          %v658 = vmul.f32 %v626, %v626
          %v659 = vadd.f32 %v627, %v628
          %660 = vadd.xlane.f32.xlu0 %v659
          %v661 = vpop.xlane.xlu0 %660
          %v662 = vadd.f32 %v629, %v630
          %663 = vadd.xlane.f32.xlu0 %v662
          %v664 = vpop.xlane.xlu0 %663
          %v665 = vadd.f32 %v631, %v632
          %666 = vadd.xlane.f32.xlu0 %v665
          %v667 = vpop.xlane.xlu0 %666
          %v668 = vadd.f32 %v633, %v634
          %669 = vadd.xlane.f32.xlu0 %v668
          %v670 = vpop.xlane.xlu0 %669
          %v671 = vadd.f32 %v635, %v636
          %672 = vadd.xlane.f32.xlu0 %v671
          %v673 = vpop.xlane.xlu0 %672
          %v674 = vadd.f32 %v637, %v638
          %675 = vadd.xlane.f32.xlu0 %v674
          %v676 = vpop.xlane.xlu0 %675
          %v677 = vadd.f32 %v639, %v640
          %678 = vadd.xlane.f32.xlu0 %v677
          %v679 = vpop.xlane.xlu0 %678
          %v680 = vadd.f32 %v641, %v642
          %681 = vadd.xlane.f32.xlu0 %v680
          %v682 = vpop.xlane.xlu0 %681
          %v683 = vadd.f32 %v643, %v644
          %684 = vadd.xlane.f32.xlu0 %v683
          %v685 = vpop.xlane.xlu0 %684
          %v686 = vadd.f32 %v645, %v646
          %687 = vadd.xlane.f32.xlu0 %v686
          %v688 = vpop.xlane.xlu0 %687
          %v689 = vadd.f32 %v647, %v648
          %690 = vadd.xlane.f32.xlu0 %v689
          %v691 = vpop.xlane.xlu0 %690
          %v692 = vadd.f32 %v649, %v650
          %693 = vadd.xlane.f32.xlu0 %v692
          %v694 = vpop.xlane.xlu0 %693
          %v695 = vadd.f32 %v651, %v652
          %696 = vadd.xlane.f32.xlu0 %v695
          %v697 = vpop.xlane.xlu0 %696
          %v698 = vadd.f32 %v653, %v654
          %699 = vadd.xlane.f32.xlu0 %v698
          %v700 = vpop.xlane.xlu0 %699
          %v701 = vadd.f32 %v655, %v656
          %702 = vadd.xlane.f32.xlu0 %v701
          %v703 = vpop.xlane.xlu0 %702
          %v704 = vadd.f32 %v657, %v658
          %705 = vadd.xlane.f32.xlu0 %v704
          %v706 = vpop.xlane.xlu0 %705
          %v707 = vmul.f32 %v661, 0.00390625
          %v708 = vmul.f32 %v664, 0.00390625
          %v709 = vmul.f32 %v667, 0.00390625
          %v710 = vmul.f32 %v670, 0.00390625
          %v711 = vmul.f32 %v673, 0.00390625
          %v712 = vmul.f32 %v676, 0.00390625
          %v713 = vmul.f32 %v679, 0.00390625
          %v714 = vmul.f32 %v682, 0.00390625
          %v715 = vmul.f32 %v685, 0.00390625
          %v716 = vmul.f32 %v688, 0.00390625
          %v717 = vmul.f32 %v691, 0.00390625
          %v718 = vmul.f32 %v694, 0.00390625
          %v719 = vmul.f32 %v697, 0.00390625
          %v720 = vmul.f32 %v700, 0.00390625
          %v721 = vmul.f32 %v703, 0.00390625
          %v722 = vmul.f32 %v706, 0.00390625
          %v723 = vadd.f32 %v707, 1e-05
          %v724 = vadd.f32 %v708, 1e-05
          %v725 = vadd.f32 %v709, 1e-05
          %v726 = vadd.f32 %v710, 1e-05
          %v727 = vadd.f32 %v711, 1e-05
          %v728 = vadd.f32 %v712, 1e-05
          %v729 = vadd.f32 %v713, 1e-05
          %v730 = vadd.f32 %v714, 1e-05
          %v731 = vadd.f32 %v715, 1e-05
          %v732 = vadd.f32 %v716, 1e-05
          %v733 = vadd.f32 %v717, 1e-05
          %v734 = vadd.f32 %v718, 1e-05
          %v735 = vadd.f32 %v719, 1e-05
          %v736 = vadd.f32 %v720, 1e-05
          %v737 = vadd.f32 %v721, 1e-05
          %v738 = vadd.f32 %v722, 1e-05
          %v739 = vrsqrt.pop %v723
          %v740 = vrsqrt.pop %v724
          %v741 = vrsqrt.pop %v725
          %v742 = vrsqrt.pop %v726
          %v743 = vrsqrt.pop %v727
          %v744 = vrsqrt.pop %v728
          %v745 = vrsqrt.pop %v729
          %v746 = vrsqrt.pop %v730
          %v747 = vrsqrt.pop %v731
          %v748 = vrsqrt.pop %v732
          %v749 = vrsqrt.pop %v733
          %v750 = vrsqrt.pop %v734
          %v751 = vrsqrt.pop %v735
          %v752 = vrsqrt.pop %v736
          %v753 = vrsqrt.pop %v737
          %v754 = vrsqrt.pop %v738
          %v755 = vmul.f32 %v595, %v739
          %v756 = vmul.f32 %v596, %v739
          %v757 = vmul.f32 %v597, %v740
          %v758 = vmul.f32 %v598, %v740
          %v759 = vmul.f32 %v599, %v741
          %v760 = vmul.f32 %v600, %v741
          %v761 = vmul.f32 %v601, %v742
          %v762 = vmul.f32 %v602, %v742
          %v763 = vmul.f32 %v603, %v743
          %v764 = vmul.f32 %v604, %v743
          %v765 = vmul.f32 %v605, %v744
          %v766 = vmul.f32 %v606, %v744
          %v767 = vmul.f32 %v607, %v745
          %v768 = vmul.f32 %v608, %v745
          %v769 = vmul.f32 %v609, %v746
          %v770 = vmul.f32 %v610, %v746
          %v771 = vmul.f32 %v611, %v747
          %v772 = vmul.f32 %v612, %v747
          %v773 = vmul.f32 %v613, %v748
          %v774 = vmul.f32 %v614, %v748
          %v775 = vmul.f32 %v615, %v749
          %v776 = vmul.f32 %v616, %v749
          %v777 = vmul.f32 %v617, %v750
          %v778 = vmul.f32 %v618, %v750
          %v779 = vmul.f32 %v619, %v751
          %v780 = vmul.f32 %v620, %v751
          %v781 = vmul.f32 %v621, %v752
          %v782 = vmul.f32 %v622, %v752
          %v783 = vmul.f32 %v623, %v753
          %v784 = vmul.f32 %v624, %v753
          %v785 = vmul.f32 %v625, %v754
          %v786 = vmul.f32 %v626, %v754
          %v787 = vmax.f32 %v755, 0.0
          %v788 = vmax.f32 %v756, 0.0
          %v789 = vmax.f32 %v757, 0.0
          %v790 = vmax.f32 %v758, 0.0
          %v791 = vmax.f32 %v759, 0.0
          %v792 = vmax.f32 %v760, 0.0
          %v793 = vmax.f32 %v761, 0.0
          %v794 = vmax.f32 %v762, 0.0
          %v795 = vmax.f32 %v763, 0.0
          %v796 = vmax.f32 %v764, 0.0
          %v797 = vmax.f32 %v765, 0.0
          %v798 = vmax.f32 %v766, 0.0
          %v799 = vmax.f32 %v767, 0.0
          %v800 = vmax.f32 %v768, 0.0
          %v801 = vmax.f32 %v769, 0.0
          %v802 = vmax.f32 %v770, 0.0
          %v803 = vmax.f32 %v771, 0.0
          %v804 = vmax.f32 %v772, 0.0
          %v805 = vmax.f32 %v773, 0.0
          %v806 = vmax.f32 %v774, 0.0
          %v807 = vmax.f32 %v775, 0.0
          %v808 = vmax.f32 %v776, 0.0
          %v809 = vmax.f32 %v777, 0.0
          %v810 = vmax.f32 %v778, 0.0
          %v811 = vmax.f32 %v779, 0.0
          %v812 = vmax.f32 %v780, 0.0
          %v813 = vmax.f32 %v781, 0.0
          %v814 = vmax.f32 %v782, 0.0
          %v815 = vmax.f32 %v783, 0.0
          %v816 = vmax.f32 %v784, 0.0
          %v817 = vmax.f32 %v785, 0.0
          %v818 = vmax.f32 %v786, 0.0
          %819 = vst [vmem:[%s208] sm:$0xff] %v787
          %820 = vst [vmem:[%s208 + $0x8] sm:$0xff] %v788
          %821 = vst [vmem:[%s208 + $0x10] sm:$0xff] %v789
          %822 = vst [vmem:[%s208 + $0x18] sm:$0xff] %v790
          %823 = vst [vmem:[%s208 + $0x20] sm:$0xff] %v791
          %824 = vst [vmem:[%s208 + $0x28] sm:$0xff] %v792
          %825 = vst [vmem:[%s208 + $0x30] sm:$0xff] %v793
          %826 = vst [vmem:[%s208 + $0x38] sm:$0xff] %v794
          %827 = vst [vmem:[%s208 + $0x40] sm:$0xff] %v795
          %828 = vst [vmem:[%s208 + $0x48] sm:$0xff] %v796
          %829 = vst [vmem:[%s208 + $0x50] sm:$0xff] %v797
          %830 = vst [vmem:[%s208 + $0x58] sm:$0xff] %v798
          %831 = vst [vmem:[%s208 + $0x60] sm:$0xff] %v799
          %832 = vst [vmem:[%s208 + $0x68] sm:$0xff] %v800
          %833 = vst [vmem:[%s208 + $0x70] sm:$0xff] %v801
          %834 = vst [vmem:[%s208 + $0x78] sm:$0xff] %v802
          %835 = vst [vmem:[%s208 + $0x80] sm:$0xff] %v803
          %836 = vst [vmem:[%s208 + $0x88] sm:$0xff] %v804
          %837 = vst [vmem:[%s208 + $0x90] sm:$0xff] %v805
          %838 = vst [vmem:[%s208 + $0x98] sm:$0xff] %v806
          %839 = vst [vmem:[%s208 + $0xa0] sm:$0xff] %v807
          %840 = vst [vmem:[%s208 + $0xa8] sm:$0xff] %v808
          %841 = vst [vmem:[%s208 + $0xb0] sm:$0xff] %v809
          %842 = vst [vmem:[%s208 + $0xb8] sm:$0xff] %v810
          %843 = vst [vmem:[%s208 + $0xc0] sm:$0xff] %v811
          %844 = vst [vmem:[%s208 + $0xc8] sm:$0xff] %v812
          %845 = vst [vmem:[%s208 + $0xd0] sm:$0xff] %v813
          %846 = vst [vmem:[%s208 + $0xd8] sm:$0xff] %v814
          %847 = vst [vmem:[%s208 + $0xe0] sm:$0xff] %v815
          %848 = vst [vmem:[%s208 + $0xe8] sm:$0xff] %v816
          %849 = vst [vmem:[%s208 + $0xf0] sm:$0xff] %v817
          %850 = vst [vmem:[%s208 + $0xf8] sm:$0xff] %v818
        $region40: #{tpu_custom_call.1} parent=27 // pred_fallthru
          _
        %s851 = sand.u32 %s103, 1
        %s852 = scalar_lea.sflag [#allocation4], %s851
        %s853 = sand.u32 %s103, 1
        %s854 = smul.addr %s853, 256
        %s855 = scalar_lea.vmem [#allocation7], %s854
        // Predicated region
        $region41: #{tpu_custom_call.1} parent=27 // pred_check
          %p856 = pneg %p113
        $region42: #{tpu_custom_call.1} parent=27 // pred_check_branch
          %858 = sbr.rel (%p856) target = $region44
        $region43: #{tpu_custom_call.1} parent=27 // pred_region
          %s859 = smul.u32 16, %s26
          %s861 = ssub.s32 4096, 4096
          %862 = vsyncadd %s852, %s861
          %s863 = smul.addr %s859, 2
          %s864 = smul.addr %s25, 32
          %s865 = sadd.s32 %s863, %s864
          %s866 = smul.addr %s865, 128
          %s867 = scalar_lea.hbm %s2, %s866
          %s868 = sshll.u32 %s855, 4
          %s869 = int_to_ptr.vmem [resolvable:$true] %s868
          %874 = dma.vmem_to_hbm [thread:$0]  %s869, 4096, %s867, %s852, 256, 256, 16
        $region44: #{tpu_custom_call.1} parent=27 // pred_fallthru
          _
      $region28: #{tpu_custom_call.1} parent=5 // pred_fallthru
        _
      %p875 = scmp.le.s32.totalorder 2, %s15
      // Predicated region
      $region45: #{tpu_custom_call.1} parent=5 // pred_check
        %p876 = pneg %p875
      $region46: #{tpu_custom_call.1} parent=5 // pred_check_branch
        %878 = sbr.rel (%p876) target = $region48
      $region47: #{tpu_custom_call.1} parent=5 // pred_region
        %s879 = ssub.s32 %s15, 2
        // Predicated region
        $region49: #{tpu_custom_call.1} parent=47 // pred_check
          %p880 = pneg %p119
        $region50: #{tpu_custom_call.1} parent=47 // pred_check_branch
          %882 = sbr.rel (%p880) target = $region52
        $region51: #{tpu_custom_call.1} parent=47 // pred_region
          %s883 = sand.u32 %s104, 1
          %s884 = scalar_lea.sflag [#allocation4], %s883
          %s885 = sand.u32 %s104, 1
          %s886 = smul.addr %s885, 256
          %s887 = scalar_lea.vmem [#allocation7], %s886
          %888 = dma.done %s884, 4096
        $region52: #{tpu_custom_call.1} parent=47 // pred_fallthru
          _
      $region48: #{tpu_custom_call.1} parent=5 // pred_fallthru
        _
    $region6: #{tpu_custom_call.1} parent=1 // loop_footer
      %s19 = sadd.s32 1, %s15
    $region7: #{tpu_custom_call.1} parent=1 // loop_footer_branch
      %14 = sbr.rel target = $region3
    $region8: #{tpu_custom_call.1} parent=1 // loop_exit
      _
    %889 = vsyncpa [#allocation3], 1
    %s890 = scalar_lea.sflag [#allocation3], 1
    %891 = vsyncpa %s890, 1
    %892 = vsyncpa [#allocation6], 1
    %893 = vsyncpa [#allocation4], 1
    %s894 = scalar_lea.sflag [#allocation4], 1
    %895 = vsyncpa %s894, 1

</llo_original>
